<compile_context>
chip_gen: v5e
topology: v5e:2x2
jax: 0.10.0
libtpu: 0.0.40
codegen_flags: <defaults>
</compile_context>

<pallas_src>
import functools

import jax
import jax.numpy as jnp
from jax.experimental import pallas as pl
from jax.experimental.pallas import tpu as pltpu

IN_FEATURES = 50
HIDDEN = 64
OUT_FEATURES = 1


def _round_up(n, m):
    return ((n + m - 1) // m) * m


def _cdiv(a, b):
    return -(-a // b)


def _choose_batch_tile(B, block_b):
    """Pick (tile, padded_batch, n_tiles) with bounded padding waste and,
    for large batches, at least 2 grid steps (v7x megacore split)."""
    B8 = _round_up(max(B, 8), 8)
    n_tiles = _cdiv(B8, block_b)
    if n_tiles == 1 and B8 >= 4096:
        n_tiles = 2                      # let dimension_semantics=("parallel",) help on v7x
    TB = _round_up(_cdiv(B8, n_tiles), 8)
    Bp = TB * n_tiles
    return TB, Bp, n_tiles


def mlp_kernel(b2_ref, x_ref, w1_ref, b1_ref, w2_ref, o_ref, *, compute_dtype):
    # b2_ref: (1,) scalar-prefetch (SMEM)
    # x_ref : (TB, 50)   w1_ref: (50, 64)   b1_ref: (1, 64)   w2_ref: (1, 64)
    # o_ref : (TB, 1)
    x = x_ref[...]
    if compute_dtype != jnp.float32:
        x = x.astype(compute_dtype)      # w1/w2 are pre-cast in the wrapper

    # Linear(50 -> 64) on the MXU, f32 accumulation; bias add in f32.
    h = jnp.dot(x, w1_ref[...], preferred_element_type=jnp.float32)
    h = h + b1_ref[...]

    # Double Tanh (EUP). bf16 path halves EUP cost on v6e/v7x.
    if compute_dtype != jnp.float32:
        h = h.astype(compute_dtype)
    h = jnp.tanh(jnp.tanh(h))

    # Linear(64 -> 1): N=1 matmul done as VPU multiply + lane reduction,
    # accumulating in f32 (no extra cast pass over the (TB, 64) tile).
    y = jnp.sum(h * w2_ref[...], axis=-1, keepdims=True, dtype=jnp.float32)
    y = y + b2_ref[0]

    o_ref[...] = y.astype(o_ref.dtype)


def integrated_model_forward(x, w1, b1, w2, b2, *, block_b=8192,
                             compute_dtype=jnp.float32):
    """Fused forward of IntegratedModel.

    x: (B, 50) f32, w1: (50, 64), b1: (1, 64), w2: (64, 1), b2: (1, 1).
    Returns (B, 1) f32. compute_dtype=jnp.bfloat16 enables the fast path on
    v6e/v7x (relaxed tolerance); keep f32 on v5e.
    """
    B, F = x.shape
    H = w1.shape[1]

    TB, Bp, n_tiles = _choose_batch_tile(B, block_b)
    if Bp != B:
        x = jnp.pad(x, ((0, Bp - B), (0, 0)))

    w1_c = w1.astype(compute_dtype)
    w2_row = w2.reshape(1, H).astype(compute_dtype)   # (64,1) -> (1,64) for the VPU reduce
    b1_r = b1.reshape(1, H).astype(jnp.float32)
    b2_s = b2.reshape(-1).astype(jnp.float32)         # (1,) scalar prefetch -> SMEM

    isz = jnp.dtype(compute_dtype).itemsize
    cost = pl.CostEstimate(
        flops=2 * Bp * F * H + 4 * Bp * H + 2 * Bp,
        transcendentals=2 * Bp * H,
        bytes_accessed=(Bp * F * 4 + Bp * 4) + (F * H + H) * isz + (H + 1) * 4,
    )

    out = pl.pallas_call(
        functools.partial(mlp_kernel, compute_dtype=compute_dtype),
        out_shape=jax.ShapeDtypeStruct((Bp, 1), jnp.float32),
        grid_spec=pltpu.PrefetchScalarGridSpec(
            num_scalar_prefetch=1,                    # b2 scalar -> SMEM
            grid=(n_tiles,),
            in_specs=[
                # Streamed input: one batch tile per grid step (double-buffered).
                pl.BlockSpec((TB, F), lambda i, b2: (i, 0)),
                # Weights/biases: constant index_map -> VMEM-resident across steps.
                pl.BlockSpec((F, H), lambda i, b2: (0, 0)),
                pl.BlockSpec((1, H), lambda i, b2: (0, 0)),
                pl.BlockSpec((1, H), lambda i, b2: (0, 0)),
            ],
            out_specs=pl.BlockSpec((TB, 1), lambda i, b2: (i, 0)),
        ),
        compiler_params=pltpu.CompilerParams(
            dimension_semantics=("parallel",),        # megacore-shardable on v7x
            vmem_limit_bytes=32 * 1024 * 1024,        # safe on v5e/v6e/v7x (64 MiB phys)
        ),
        cost_estimate=cost,
    )(b2_s, x, w1_c, b1_r, w2_row)

    return out[:B]


def init_params(key):
    """Deterministic init mimicking nn.Linear default U[-1/sqrt(fan_in), +1/sqrt(fan_in)].
    Weights stored as (in_features, out_features)."""
    k1, k2, k3, k4 = jax.random.split(key, 4)
    in1, hid, out = IN_FEATURES, HIDDEN, OUT_FEATURES

    bound1 = 1.0 / jnp.sqrt(jnp.float32(in1))
    w1 = jax.random.uniform(k1, (in1, hid), jnp.float32, -bound1, bound1)
    b1 = jax.random.uniform(k2, (1, hid), jnp.float32, -bound1, bound1)

    bound2 = 1.0 / jnp.sqrt(jnp.float32(hid))
    w2 = jax.random.uniform(k3, (hid, out), jnp.float32, -bound2, bound2)
    b2 = jax.random.uniform(k4, (1, out), jnp.float32, -bound2, bound2)
    return w1, b1, w2, b2


def reference_forward(x, w1, b1, w2, b2):
    h = jnp.tanh(jnp.tanh(x @ w1 + b1))
    return h @ w2 + b2


if __name__ == "__main__":
    key = jax.random.PRNGKey(0)
    kx, kp = jax.random.split(key)

    w1, b1, w2, b2 = init_params(kp)

    # Primary test: small batch, single grid step, f32 path, tight tolerance.
    batch = 8
    x = jax.random.normal(kx, (batch, IN_FEATURES), dtype=jnp.float32)
    out = jax.block_until_ready(integrated_model_forward(x, w1, b1, w2, b2))
    ref = reference_forward(x, w1, b1, w2, b2)
    assert out.shape == (batch, 1), out.shape
    assert jnp.allclose(out, ref, atol=1e-5, rtol=1e-5)

    # Multi-tile + batch-padding path (grid > 1), still f32 / tight tolerance.
    batch2 = 200
    x2 = jax.random.normal(jax.random.PRNGKey(1), (batch2, IN_FEATURES), dtype=jnp.float32)
    out2 = jax.block_until_ready(
        integrated_model_forward(x2, w1, b1, w2, b2, block_b=64))
    ref2 = reference_forward(x2, w1, b1, w2, b2)
    assert out2.shape == (batch2, 1), out2.shape
    assert jnp.allclose(out2, ref2, atol=1e-5, rtol=1e-5)

    # bf16 fast path (v6e/v7x): bf16 MXU inputs + bf16 tanh, relaxed tolerance.
    batch3 = 512
    x3 = jax.random.normal(jax.random.PRNGKey(2), (batch3, IN_FEATURES), dtype=jnp.float32)
    out3 = jax.block_until_ready(
        integrated_model_forward(x3, w1, b1, w2, b2, block_b=128,
                                 compute_dtype=jnp.bfloat16))
    ref3 = reference_forward(x3, w1, b1, w2, b2)
    assert out3.shape == (batch3, 1), out3.shape
    assert jnp.allclose(out3, ref3, atol=5e-2, rtol=5e-2)

    print("KERNEL_OK")
</pallas_src>

<mosaic_0001>
module attributes {stable_mosaic.version = 11 : i64} {
  func.func @mlp_kernel(%arg0: i32, %arg1: memref<1xf32, #tpu.memory_space<smem>>, %arg2: memref<8x50xf32, #tpu.memory_space<vmem>>, %arg3: memref<50x64xf32, #tpu.memory_space<vmem>>, %arg4: memref<1x64xf32, #tpu.memory_space<vmem>>, %arg5: memref<1x64xf32, #tpu.memory_space<vmem>>, %arg6: memref<8x1xf32, #tpu.memory_space<vmem>>) attributes {dimension_semantics = [#tpu.dimension_semantics<parallel>], iteration_bounds = array<i64: 1>, scalar_prefetch = 1 : i64, scratch_operands = 0 : i64, tpu.core_type = #tpu.core_type<tc>, window_params = [{transform_indices = @transform_0, window_bounds = array<i64: 8, 50>}, {pipeline_mode = #tpu.pipeline_mode<synchronous>, transform_indices = @transform_1, window_bounds = array<i64: 50, 64>}, {pipeline_mode = #tpu.pipeline_mode<synchronous>, transform_indices = @transform_2, window_bounds = array<i64: 1, 64>}, {pipeline_mode = #tpu.pipeline_mode<synchronous>, transform_indices = @transform_3, window_bounds = array<i64: 1, 64>}, {transform_indices = @transform_4, window_bounds = array<i64: 8, 1>}]} {
    %c0 = arith.constant 0 : index
    %c0_0 = arith.constant 0 : index
    %0 = vector.load %arg2[%c0, %c0_0] : memref<8x50xf32, #tpu.memory_space<vmem>>, vector<8x50xf32>
    %c0_1 = arith.constant 0 : index
    %c0_2 = arith.constant 0 : index
    %1 = vector.load %arg3[%c0_1, %c0_2] : memref<50x64xf32, #tpu.memory_space<vmem>>, vector<50x64xf32>
    %cst = arith.constant dense<0.000000e+00> : vector<8x64xf32>
    %2 = tpu.matmul %0, %1, %cst {dimension_numbers = #tpu.dot_dimension_numbers<[1], [0], [0], [1], [0, 0, 1, 1], [], []>} : vector<8x50xf32>, vector<50x64xf32>, vector<8x64xf32> -> vector<8x64xf32>
    %c0_3 = arith.constant 0 : index
    %c0_4 = arith.constant 0 : index
    %3 = vector.load %arg4[%c0_3, %c0_4] : memref<1x64xf32, #tpu.memory_space<vmem>>, vector<1x64xf32>
    %4 = vector.broadcast %3 : vector<1x64xf32> to vector<8x64xf32>
    %5 = arith.addf %2, %4 : vector<8x64xf32>
    %6 = math.tanh %5 : vector<8x64xf32>
    %7 = math.tanh %6 : vector<8x64xf32>
    %c0_5 = arith.constant 0 : index
    %c0_6 = arith.constant 0 : index
    %8 = vector.load %arg5[%c0_5, %c0_6] : memref<1x64xf32, #tpu.memory_space<vmem>>, vector<1x64xf32>
    %9 = vector.broadcast %8 : vector<1x64xf32> to vector<8x64xf32>
    %10 = arith.mulf %7, %9 : vector<8x64xf32>
    %cst_7 = arith.constant dense<0.000000e+00> : vector<8xf32>
    %11 = vector.multi_reduction <add>, %10, %cst_7 [1] : vector<8x64xf32> to vector<8xf32>
    %12 = vector.shape_cast %11 : vector<8xf32> to vector<8x1xf32>
    %c0_8 = arith.constant 0 : index
    %13 = memref.load %arg1[%c0_8] : memref<1xf32, #tpu.memory_space<smem>>
    %14 = vector.broadcast %13 : f32 to vector<8x1xf32>
    %15 = arith.addf %12, %14 : vector<8x1xf32>
    %c0_9 = arith.constant 0 : index
    %c0_10 = arith.constant 0 : index
    %16 = vector.load %arg6[%c0_9, %c0_10] : memref<8x1xf32, #tpu.memory_space<vmem>>, vector<8x1xf32>
    tpu.vector_store %arg6[%c0_9, %c0_10], %15 {strides = array<i32>} : memref<8x1xf32, #tpu.memory_space<vmem>>, vector<8x1xf32>,
    return
  }
  func.func @transform_0(%arg0: i32, %arg1: memref<1xf32, #tpu.memory_space<smem>>) -> (i32, i32) {
    %c0_i32 = arith.constant 0 : i32
    %c0_i32_0 = arith.constant 0 : i32
    return %arg0, %c0_i32 : i32, i32
  }
  func.func @transform_1(%arg0: i32, %arg1: memref<1xf32, #tpu.memory_space<smem>>) -> (i32, i32) {
    %c0_i32 = arith.constant 0 : i32
    %c0_i32_0 = arith.constant 0 : i32
    %c0_i32_1 = arith.constant 0 : i32
    return %c0_i32, %c0_i32_0 : i32, i32
  }
  func.func @transform_2(%arg0: i32, %arg1: memref<1xf32, #tpu.memory_space<smem>>) -> (i32, i32) {
    %c0_i32 = arith.constant 0 : i32
    %c0_i32_0 = arith.constant 0 : i32
    %c0_i32_1 = arith.constant 0 : i32
    return %c0_i32, %c0_i32_0 : i32, i32
  }
  func.func @transform_3(%arg0: i32, %arg1: memref<1xf32, #tpu.memory_space<smem>>) -> (i32, i32) {
    %c0_i32 = arith.constant 0 : i32
    %c0_i32_0 = arith.constant 0 : i32
    %c0_i32_1 = arith.constant 0 : i32
    return %c0_i32, %c0_i32_0 : i32, i32
  }
  func.func @transform_4(%arg0: i32, %arg1: memref<1xf32, #tpu.memory_space<smem>>) -> (i32, i32) {
    %c0_i32 = arith.constant 0 : i32
    %c0_i32_0 = arith.constant 0 : i32
    return %arg0, %c0_i32 : i32, i32
  }
}

</mosaic_0001>

<llo_original>
// kernel: tpu_custom_call.1
$region0: #{tpu_custom_call.1}
  #allocation0 [shape = 'u32[]', space=smem, size = 0x4, offset = 0x4, fixed_abs, tag = 'smem constant byte address 0x4 - core index']
  #allocation1 [shape = 'u32[72,128]{1,0:T(1,128)}', space=vmem, size = 0x9000, scoped, tag = 'internal scratch']
  #allocation2 [shape = 's32[1]{0}', space=sflag, size = 0x4, scoped, tag = 'scoped memory for tpu_custom_call.1']
  #allocation3 [shape = 'f32[1]{0:T(128)S(6)}', space=smem, size = 0x200, scoped, tag = 'prefetched SMEM operand 0']
  %s0 = inlined_call_operand.<no memory space> [shape: f32[1], index: 0, kind: input, shape index: {}]
  %s1 = inlined_call_operand.hbm [shape: f32[8,50], index: 1, kind: input, shape index: {}]
  %s2 = inlined_call_operand.hbm [shape: f32[50,64], index: 2, kind: input, shape index: {}]
  %s3 = inlined_call_operand.vmem [shape: f32[1,64], index: 3, kind: input, shape index: {}]
  %s4 = inlined_call_operand.vmem [shape: f32[1,64], index: 4, kind: input, shape index: {}]
  %s5 = inlined_call_operand.vmem [shape: f32[8,1], index: 5, kind: output, shape index: {}]
  %s6 = sld [smem:[#allocation0]]
  $region34: #{tpu_custom_call.1} parent=0
    _
  %s8 = ssub.s32 1, %s6
  %s9 = scalar_select 0, %s8, %s6
  %10 = sst [smem:[#allocation3]] %s0
  $region1: #{tpu_custom_call.1} parent=0
    #allocation4 [shape = 'u8[4096]{0}', space=vmem, size = 0x1000, scoped, tag = 'input window, operand 1, single buffered']
    #allocation5 [shape = 's32[1]{0}', space=sflag, size = 0x4, scoped, tag = 'scoped memory for tpu_custom_call.1']
    #allocation6 [shape = 'u8[28672]{0}', space=vmem, size = 0x7000, scoped, tag = 'input window, operand 2, single buffered']
    #allocation7 [shape = 's32[1]{0}', space=sflag, size = 0x4, scoped, tag = 'scoped memory for tpu_custom_call.1']
    %11 = vsyncpa [#allocation5], 0
    %12 = vsyncpa [#allocation7], 0
    // Predicated region
    $region2: #{tpu_custom_call.1} parent=1 // pred_check
      _
    $region3: #{tpu_custom_call.1} parent=1 // pred_check_branch
      %14 = sbr.rel (0) target = $region5
    $region4: #{tpu_custom_call.1} parent=1 // pred_region
      %16 = vsyncadd [#allocation5], 0
      %s18 = sshll.u32 %s1, 4
      %s19 = int_to_ptr.hbm [resolvable:$true] %s18
      %s20 = sshll.u32 [#allocation4], 4
      %s21 = int_to_ptr.vmem [resolvable:$true] %s20
      %23 = dma.hbm_to_vmem [thread:$0]  %s19, 128, %s21, [#allocation5]
    $region5: #{tpu_custom_call.1} parent=1 // pred_fallthru
      _
    // Predicated region
    $region6: #{tpu_custom_call.1} parent=1 // pred_check
      _
    $region7: #{tpu_custom_call.1} parent=1 // pred_check_branch
      %25 = sbr.rel (0) target = $region9
    $region8: #{tpu_custom_call.1} parent=1 // pred_region
      %27 = vsyncadd [#allocation7], 0
      %s28 = sshll.u32 %s2, 4
      %s29 = int_to_ptr.hbm [resolvable:$true] %s28
      %s30 = sshll.u32 [#allocation6], 4
      %s31 = int_to_ptr.vmem [resolvable:$true] %s30
      %36 = dma.hbm_to_vmem [thread:$0]  %s29, 896, %s31, [#allocation7], 128, 128, 8
    $region9: #{tpu_custom_call.1} parent=1 // pred_fallthru
      _
    // Predicated region
    $region10: #{tpu_custom_call.1} parent=1 // pred_check
      _
    $region11: #{tpu_custom_call.1} parent=1 // pred_check_branch
      %38 = sbr.rel (0) target = $region13
    $region12: #{tpu_custom_call.1} parent=1 // pred_region
      _
    $region13: #{tpu_custom_call.1} parent=1 // pred_fallthru
      _
    // Predicated region
    $region14: #{tpu_custom_call.1} parent=1 // pred_check
      _
    $region15: #{tpu_custom_call.1} parent=1 // pred_check_branch
      %40 = sbr.rel (0) target = $region17
    $region16: #{tpu_custom_call.1} parent=1 // pred_region
      _
    $region17: #{tpu_custom_call.1} parent=1 // pred_fallthru
      _
    // Predicated region
    $region18: #{tpu_custom_call.1} parent=1 // pred_check
      _
    $region19: #{tpu_custom_call.1} parent=1 // pred_check_branch
      %42 = sbr.rel (0) target = $region21
    $region20: #{tpu_custom_call.1} parent=1 // pred_region
      %44 = dma.done [#allocation5], 128
    $region21: #{tpu_custom_call.1} parent=1 // pred_fallthru
      _
    // Predicated region
    $region22: #{tpu_custom_call.1} parent=1 // pred_check
      _
    $region23: #{tpu_custom_call.1} parent=1 // pred_check_branch
      %46 = sbr.rel (0) target = $region25
    $region24: #{tpu_custom_call.1} parent=1 // pred_region
      %48 = dma.done [#allocation7], 896
    $region25: #{tpu_custom_call.1} parent=1 // pred_fallthru
      _
    %v49 = vld [vmem:[#allocation4] sm:$0xff]
    %v50 = vld [vmem:[#allocation6] sm:$0xff]
    %v51 = vld [vmem:[#allocation6 + $0x8] sm:$0xff]
    %v52 = vld [vmem:[#allocation6 + $0x10] sm:$0xff]
    %v53 = vld [vmem:[#allocation6 + $0x18] sm:$0xff]
    %v54 = vld [vmem:[#allocation6 + $0x20] sm:$0xff]
    %v55 = vld [vmem:[#allocation6 + $0x28] sm:$0xff]
    %v56 = vld [vmem:[#allocation6 + $0x30] sm:$0x3]
    %v57 = vld [vmem:[%s3] sm:$0x1]
    %v59 = vperm.slane %v57, 0
    %vm61 = vcmask 408576
    %v63 = vsel %vm61, %v49, 0
    %vm65 = vcmask 1041408
    %v67 = vsel %vm65, %v56, 0
    %69 = vmatpush.msra.mxu0 0.0
    %70 = vmatpush.msra.mxu0 0.0
    %71 = vmatpush.msra.mxu0 0.0
    %72 = vmatpush.msra.mxu0 0.0
    %73 = vmatpush.msra.mxu0 0.0
    %74 = vmatpush.msra.mxu0 0.0
    %75 = vmatpush.msra.mxu0 0.0
    %76 = vmatpush.msra.mxu0 0.0
    %77 = vmatpush.msra.mxu0 0.0
    %78 = vmatpush.msra.mxu0 %v67
    %79 = vmatpush.msra.mxu0 %v55
    %80 = vmatpush.msra.mxu0 %v54
    %81 = vmatpush.msra.mxu0 %v53
    %82 = vmatpush.msra.mxu0 %v52
    %83 = vmatpush.msra.mxu0 %v51
    %84 = vmatpush.msra.mxu0 %v50
    %85 = vmatmul.f32.gmra.mxu0 %v63
    %v86 = vpop.f32.mrf.mxu0
    %v87 = vadd.f32 %v59, %v86
    %88 = vdwg.mxu0
    %v89 = vtanh.pop %v87
    %v90 = vtanh.pop %v89
    %v91 = vld [vmem:[%s4] sm:$0x1]
    %v93 = vperm.slane %v91, 0
    %v95 = vmul.f32 %v90, %v93
    %vm96 = vcmask 523264
    %v97 = vsel %vm96, %v95, 0.0
    %98 = vadd.xlane.f32.xlu0 %v97
    %v99 = vpop.xlane.xlu0 %98
    %s100 = sld [smem:[#allocation3]]
    %v101 = vstv %s100
    %v102 = vadd.f32 %v99, %v101
    %vm103 = vcmask 7168
    %104 = vst.msk [vmem:[%s5] sm:$0xff] %vm103, %v102
    // Predicated region
    $region26: #{tpu_custom_call.1} parent=1 // pred_check
      _
    $region27: #{tpu_custom_call.1} parent=1 // pred_check_branch
      %106 = sbr.rel (0) target = $region29
    $region28: #{tpu_custom_call.1} parent=1 // pred_region
      _
    $region29: #{tpu_custom_call.1} parent=1 // pred_fallthru
      _
    // Predicated region
    $region30: #{tpu_custom_call.1} parent=1 // pred_check
      _
    $region31: #{tpu_custom_call.1} parent=1 // pred_check_branch
      %108 = sbr.rel (0) target = $region33
    $region32: #{tpu_custom_call.1} parent=1 // pred_region
      _
    $region33: #{tpu_custom_call.1} parent=1 // pred_fallthru
      _
    %109 = vsyncpa [#allocation5], 1
    %110 = vsyncpa [#allocation7], 1

</llo_original>
